<compile_context>
chip_gen: v6e
topology: v6e:2x2x1
jax: 0.10.0
libtpu: 0.0.40
codegen_flags: <defaults>
</compile_context>

<pallas_src>
import functools

import jax
import jax.numpy as jnp
from jax.experimental import pallas as pl
from jax.experimental.pallas import tpu as pltpu

HIDDEN = 64      # nn.Linear hidden width in the PyTorch module
HP = 128         # lane-padded hidden width used inside the kernel
BIAS_ROWS = 8    # sublane-aligned bias block appended to the slab


def _round_up(n, m):
    return ((n + m - 1) // m) * m


def _k1(state_size):
    # Input-feature rows rounded up to a 16-row granule so every weight block
    # in the slab starts on a (16, 128) bf16 tile boundary (also fine for f32).
    return max(16, _round_up(state_size, 16))


def qnet_kernel(x_ref, p_ref, o_ref, *, k1, hp):
    """x_ref: (TB, k1) batch tile (features zero-padded to k1 columns).
    p_ref: (k1 + 2*hp + 8, hp) packed parameter slab (resident across tiles):
           rows [0,k1)=W1, [k1,k1+hp)=W2, [k1+hp,k1+2hp)=W3,
           rows k1+2hp, +1, +2 = b1, b2, b3 (lane-padded with zeros).
    o_ref: (TB, hp) lane-dense output; Q-values live in the first A lanes."""
    cdt = x_ref.dtype
    # Hoist the bias loads once, above the dots (one aligned 8-row slice).
    bias = p_ref[k1 + 2 * hp:k1 + 2 * hp + BIAS_ROWS, :].astype(jnp.float32)
    b1 = bias[0:1, :]
    b2 = bias[1:2, :]
    b3 = bias[2:3, :]

    # Layer 1 (f32 accumulation on the MXU, VPU broadcast bias add).
    h = jnp.dot(x_ref[...], p_ref[0:k1, :],
                preferred_element_type=jnp.float32) + b1
    h = jnp.maximum(h, 0.0).astype(cdt)
    # Layer 2.
    h = jnp.dot(h, p_ref[k1:k1 + hp, :],
                preferred_element_type=jnp.float32) + b2
    h = jnp.maximum(h, 0.0).astype(cdt)
    # Layer 3 (no activation).
    q = jnp.dot(h, p_ref[k1 + hp:k1 + 2 * hp, :],
                preferred_element_type=jnp.float32) + b3
    o_ref[...] = q.astype(o_ref.dtype)


def init_qnetwork_params(key, state_size, action_size, hidden=HIDDEN):
    """Deterministic init mirroring nn.Linear's U(-1/sqrt(fan_in), 1/sqrt(fan_in)).
    Weights are stored (in_features, out_features) so the kernel computes x @ W + b."""
    ks = jax.random.split(key, 6)

    def linear(kw, kb, fan_in, fan_out):
        bound = 1.0 / jnp.sqrt(jnp.float32(fan_in))
        w = jax.random.uniform(kw, (fan_in, fan_out), jnp.float32, -bound, bound)
        b = jax.random.uniform(kb, (fan_out,), jnp.float32, -bound, bound)
        return w, b

    w1, b1 = linear(ks[0], ks[1], state_size, hidden)
    w2, b2 = linear(ks[2], ks[3], hidden, hidden)
    w3, b3 = linear(ks[4], ks[5], hidden, action_size)
    return {"w1": w1, "b1": b1, "w2": w2, "b2": b2, "w3": w3, "b3": b3}


def pack_qnetwork_params(params, state_size, action_size, hidden=HIDDEN,
                         hp=HP, dtype=jnp.bfloat16):
    """Pack W1,b1,W2,b2,W3,b3 into one lane-padded (K1 + 2*hp + 8, hp) slab.

    Row layout:
      [0, K1)          W1 (rows >= state_size are zero)
      [K1, K1+hp)      W2 (rows/cols >= hidden are zero)
      [K1+hp, K1+2hp)  W3 (output lanes >= action_size stay exactly 0)
      [K1+2hp, +8)     bias block: row 0 = b1, row 1 = b2, row 2 = b3
    """
    assert hidden <= hp, "hidden width must fit in the lane-padded width"
    assert action_size <= hp, "action_size must fit in the lane-padded width"
    k1 = _k1(state_size)
    assert state_size <= k1

    w1, b1 = params["w1"], params["b1"].reshape(-1)
    w2, b2 = params["w2"], params["b2"].reshape(-1)
    w3, b3 = params["w3"], params["b3"].reshape(-1)

    slab = jnp.zeros((k1 + 2 * hp + BIAS_ROWS, hp), jnp.float32)
    slab = slab.at[:state_size, :hidden].set(w1)                       # W1
    slab = slab.at[k1:k1 + hidden, :hidden].set(w2)                    # W2
    slab = slab.at[k1 + hp:k1 + hp + hidden, :action_size].set(w3)     # W3
    slab = slab.at[k1 + 2 * hp + 0, :hidden].set(b1)                   # b1
    slab = slab.at[k1 + 2 * hp + 1, :hidden].set(b2)                   # b2
    slab = slab.at[k1 + 2 * hp + 2, :action_size].set(b3)              # b3
    return slab.astype(dtype)


@functools.partial(
    jax.jit,
    static_argnames=("state_size", "action_size", "hp", "max_tile",
                     "split_threshold", "return_padded"))
def qnetwork_forward(x, packed_params, *, state_size, action_size, hp=HP,
                     max_tile=1024, split_threshold=512, return_padded=False):
    """x: (B, state_size). packed_params: output of pack_qnetwork_params."""
    B = x.shape[0]
    assert x.shape[1] == state_size
    k1 = packed_params.shape[0] - 2 * hp - BIAS_ROWS
    cdt = packed_params.dtype

    # Tile the batch: big tiles amortize the ~0.35us/step grid overhead; for
    # large batches force >= 2 grid steps so the "parallel" axis can shard
    # across both v7x TensorCores (no-op cost on 1-TC v5e/v6e).
    b8 = max(8, _round_up(B, 8))
    tb = min(max_tile, b8)
    if b8 >= split_threshold:
        tb = min(tb, _round_up(pl.cdiv(b8, 2), 8))
    b_pad = pl.cdiv(b8, tb) * tb

    # Single pad (batch rows + feature columns together); cast to the compute
    # dtype so both MXU operands are native bf16 when the slab is bf16.
    x_p = jnp.pad(x.astype(cdt), ((0, b_pad - B), (0, k1 - state_size)))

    itemsize = jnp.dtype(cdt).itemsize
    cost = pl.CostEstimate(
        flops=int(2 * b_pad * (k1 + 2 * hp) * hp),
        transcendentals=0,
        bytes_accessed=int((b_pad * k1 + packed_params.size + b_pad * hp)
                           * itemsize))

    grid = (b_pad // tb,)
    out = pl.pallas_call(
        functools.partial(qnet_kernel, k1=k1, hp=hp),
        out_shape=jax.ShapeDtypeStruct((b_pad, hp), cdt),
        grid=grid,
        in_specs=[
            pl.BlockSpec((tb, k1), lambda i: (i, 0)),               # x streams
            pl.BlockSpec(packed_params.shape, lambda i: (0, 0)),    # params resident
        ],
        out_specs=pl.BlockSpec((tb, hp), lambda i: (i, 0)),         # lane-dense out
        compiler_params=pltpu.CompilerParams(
            dimension_semantics=("parallel",)),
        cost_estimate=cost,
    )(x_p, packed_params)

    if return_padded:
        # Downstream DQN ops (argmax/gather over actions) can consume the
        # padded slab directly and skip the trailing slice/relayout HLO.
        return out
    return out[:B, :action_size]


def qnetwork_ref(x, p):
    h = jnp.maximum(x @ p["w1"] + p["b1"][None, :], 0.0)
    h = jnp.maximum(h @ p["w2"] + p["b2"][None, :], 0.0)
    return h @ p["w3"] + p["b3"][None, :]


if __name__ == "__main__":
    key = jax.random.PRNGKey(0)
    k_params, k_x, k_x2, k_x3 = jax.random.split(key, 4)

    state_size = 4      # CartPole observation dim
    action_size = 2     # CartPole action dim
    batch = 2

    params = init_qnetwork_params(k_params, state_size, action_size)

    # --- f32 slab: tight-tolerance parity check against the f32 reference. ---
    packed_f32 = pack_qnetwork_params(params, state_size, action_size,
                                      dtype=jnp.float32)
    x = jax.random.normal(k_x, (batch, state_size), dtype=jnp.float32)
    out = jax.block_until_ready(
        qnetwork_forward(x, packed_f32, state_size=state_size,
                         action_size=action_size))
    ref = qnetwork_ref(x, params)
    assert out.shape == (batch, action_size)
    assert jnp.allclose(out.astype(jnp.float32), ref, atol=1e-5, rtol=1e-5)

    # --- bf16 slab (production path): halved param DMA and output writeback;
    #     relaxed tolerance vs the f32 reference. ---
    packed_bf16 = pack_qnetwork_params(params, state_size, action_size,
                                       dtype=jnp.bfloat16)
    x_big = jax.random.normal(k_x2, (300, state_size), dtype=jnp.float32)
    out_big = jax.block_until_ready(
        qnetwork_forward(x_big, packed_bf16, state_size=state_size,
                         action_size=action_size))
    ref_big = qnetwork_ref(x_big, params)
    assert out_big.shape == (300, action_size)
    assert jnp.allclose(out_big.astype(jnp.float32), ref_big,
                        atol=5e-2, rtol=5e-2)

    # --- large batch: exercises the >=2-step "parallel" grid (v7x dual-TC). ---
    x_huge = jax.random.normal(k_x3, (2048, state_size), dtype=jnp.float32)
    out_huge = jax.block_until_ready(
        qnetwork_forward(x_huge, packed_bf16, state_size=state_size,
                         action_size=action_size))
    assert out_huge.shape == (2048, action_size)
    assert jnp.allclose(out_huge.astype(jnp.float32),
                        qnetwork_ref(x_huge, params), atol=5e-2, rtol=5e-2)

    print("KERNEL_OK")
</pallas_src>

<mosaic_0001>
module attributes {stable_mosaic.version = 11 : i64} {
  func.func @qnet_kernel(%arg0: i32, %arg1: memref<8x16xf32, #tpu.memory_space<vmem>>, %arg2: memref<280x128xf32, #tpu.memory_space<vmem>>, %arg3: memref<8x128xf32, #tpu.memory_space<vmem>>) attributes {dimension_semantics = [#tpu.dimension_semantics<parallel>], iteration_bounds = array<i64: 1>, scalar_prefetch = 0 : i64, scratch_operands = 0 : i64, tpu.core_type = #tpu.core_type<tc>, window_params = [{transform_indices = @transform_0, window_bounds = array<i64: 8, 16>}, {pipeline_mode = #tpu.pipeline_mode<synchronous>, transform_indices = @transform_1, window_bounds = array<i64: 280, 128>}, {transform_indices = @transform_2, window_bounds = array<i64: 8, 128>}]} {
    %c272 = arith.constant 272 : index
    %c0 = arith.constant 0 : index
    %0 = vector.load %arg2[%c272, %c0] : memref<280x128xf32, #tpu.memory_space<vmem>>, vector<8x128xf32>
    %1 = vector.extract_strided_slice %0 {offsets = [0, 0], sizes = [1, 128], strides = [1, 1]} : vector<8x128xf32> to vector<1x128xf32>
    %2 = vector.extract_strided_slice %0 {offsets = [1, 0], sizes = [1, 128], strides = [1, 1]} : vector<8x128xf32> to vector<1x128xf32>
    %3 = vector.extract_strided_slice %0 {offsets = [2, 0], sizes = [1, 128], strides = [1, 1]} : vector<8x128xf32> to vector<1x128xf32>
    %c0_0 = arith.constant 0 : index
    %c0_1 = arith.constant 0 : index
    %4 = vector.load %arg1[%c0_0, %c0_1] : memref<8x16xf32, #tpu.memory_space<vmem>>, vector<8x16xf32>
    %c0_2 = arith.constant 0 : index
    %c0_3 = arith.constant 0 : index
    %5 = vector.load %arg2[%c0_2, %c0_3] : memref<280x128xf32, #tpu.memory_space<vmem>>, vector<16x128xf32>
    %cst = arith.constant dense<0.000000e+00> : vector<8x128xf32>
    %6 = tpu.matmul %4, %5, %cst {dimension_numbers = #tpu.dot_dimension_numbers<[1], [0], [0], [1], [0, 0, 1, 1], [], []>} : vector<8x16xf32>, vector<16x128xf32>, vector<8x128xf32> -> vector<8x128xf32>
    %7 = vector.broadcast %1 : vector<1x128xf32> to vector<8x128xf32>
    %8 = arith.addf %6, %7 : vector<8x128xf32>
    %cst_4 = arith.constant 0.000000e+00 : f32
    %9 = vector.broadcast %cst_4 : f32 to vector<8x128xf32>
    %10 = arith.maximumf %8, %9 : vector<8x128xf32>
    %c16 = arith.constant 16 : index
    %c0_5 = arith.constant 0 : index
    %11 = vector.load %arg2[%c16, %c0_5] : memref<280x128xf32, #tpu.memory_space<vmem>>, vector<128x128xf32>
    %cst_6 = arith.constant dense<0.000000e+00> : vector<8x128xf32>
    %12 = tpu.matmul %10, %11, %cst_6 {dimension_numbers = #tpu.dot_dimension_numbers<[1], [0], [0], [1], [0, 0, 1, 1], [], []>} : vector<8x128xf32>, vector<128x128xf32>, vector<8x128xf32> -> vector<8x128xf32>
    %13 = vector.broadcast %2 : vector<1x128xf32> to vector<8x128xf32>
    %14 = arith.addf %12, %13 : vector<8x128xf32>
    %cst_7 = arith.constant 0.000000e+00 : f32
    %15 = vector.broadcast %cst_7 : f32 to vector<8x128xf32>
    %16 = arith.maximumf %14, %15 : vector<8x128xf32>
    %c144 = arith.constant 144 : index
    %c0_8 = arith.constant 0 : index
    %17 = vector.load %arg2[%c144, %c0_8] : memref<280x128xf32, #tpu.memory_space<vmem>>, vector<128x128xf32>
    %cst_9 = arith.constant dense<0.000000e+00> : vector<8x128xf32>
    %18 = tpu.matmul %16, %17, %cst_9 {dimension_numbers = #tpu.dot_dimension_numbers<[1], [0], [0], [1], [0, 0, 1, 1], [], []>} : vector<8x128xf32>, vector<128x128xf32>, vector<8x128xf32> -> vector<8x128xf32>
    %19 = vector.broadcast %3 : vector<1x128xf32> to vector<8x128xf32>
    %20 = arith.addf %18, %19 : vector<8x128xf32>
    %c0_10 = arith.constant 0 : index
    %c0_11 = arith.constant 0 : index
    %21 = vector.load %arg3[%c0_10, %c0_11] : memref<8x128xf32, #tpu.memory_space<vmem>>, vector<8x128xf32>
    tpu.vector_store %arg3[%c0_10, %c0_11], %20 {strides = array<i32>} : memref<8x128xf32, #tpu.memory_space<vmem>>, vector<8x128xf32>,
    return
  }
  func.func @transform_0(%arg0: i32) -> (i32, i32) {
    %c0_i32 = arith.constant 0 : i32
    %c0_i32_0 = arith.constant 0 : i32
    return %arg0, %c0_i32 : i32, i32
  }
  func.func @transform_1(%arg0: i32) -> (i32, i32) {
    %c0_i32 = arith.constant 0 : i32
    %c0_i32_0 = arith.constant 0 : i32
    %c0_i32_1 = arith.constant 0 : i32
    return %c0_i32, %c0_i32_0 : i32, i32
  }
  func.func @transform_2(%arg0: i32) -> (i32, i32) {
    %c0_i32 = arith.constant 0 : i32
    %c0_i32_0 = arith.constant 0 : i32
    return %arg0, %c0_i32 : i32, i32
  }
}

</mosaic_0001>

<llo_original>
// kernel: qnetwork_forward.1
$region0: #{qnetwork_forward.1}
  #allocation0 [shape = 'u32[]', space=smem, size = 0x4, offset = 0x4, fixed_abs, tag = 'smem constant byte address 0x4 - core index']
  #allocation1 [shape = 'u32[144,128]{1,0:T(1,128)}', space=vmem, size = 0x12000, scoped, tag = 'internal scratch']
  %s0 = inlined_call_operand.vmem [shape: f32[8,16], index: 0, kind: input, shape index: {}]
  %s1 = inlined_call_operand.hbm [shape: f32[280,128], index: 1, kind: input, shape index: {}]
  %s2 = inlined_call_operand.vmem [shape: f32[8,128], index: 2, kind: output, shape index: {}]
  %s3 = sld [smem:[#allocation0]]
  $region22: #{qnetwork_forward.1} parent=0
    _
  %s5 = ssub.s32 1, %s3
  %s6 = scalar_select 0, %s5, %s3
  $region1: #{qnetwork_forward.1} parent=0
    #allocation2 [shape = 'u8[143360]{0}', space=vmem, size = 0x23000, scoped, tag = 'input window, operand 1, single buffered']
    #allocation3 [shape = 's32[1]{0}', space=sflag, size = 0x4, scoped, tag = 'scoped memory for qnetwork_forward.1']
    %7 = vsyncpa [#allocation3], 0
    // Predicated region
    $region2: #{qnetwork_forward.1} parent=1 // pred_check
      _
    $region3: #{qnetwork_forward.1} parent=1 // pred_check_branch
      %9 = sbr.rel (0) target = $region5
    $region4: #{qnetwork_forward.1} parent=1 // pred_region
      _
    $region5: #{qnetwork_forward.1} parent=1 // pred_fallthru
      _
    // Predicated region
    $region6: #{qnetwork_forward.1} parent=1 // pred_check
      _
    $region7: #{qnetwork_forward.1} parent=1 // pred_check_branch
      %11 = sbr.rel (0) target = $region9
    $region8: #{qnetwork_forward.1} parent=1 // pred_region
      %s13 = ssub.s32 4480, 4480
      %14 = vsyncadd [#allocation3], %s13
      %s15 = sshll.u32 [#allocation2], 4
      %s16 = int_to_ptr.vmem [resolvable:$true] %s15
      %21 = dma.hbm_to_vmem [thread:$0]  %s1, 4480, %s16, [#allocation3], 128, 128, 8
    $region9: #{qnetwork_forward.1} parent=1 // pred_fallthru
      _
    // Predicated region
    $region10: #{qnetwork_forward.1} parent=1 // pred_check
      _
    $region11: #{qnetwork_forward.1} parent=1 // pred_check_branch
      %23 = sbr.rel (0) target = $region13
    $region12: #{qnetwork_forward.1} parent=1 // pred_region
      %24 = dma.done [#allocation3], 4480
    $region13: #{qnetwork_forward.1} parent=1 // pred_fallthru
      _
    %v25 = vld [vmem:[#allocation2 + $0x110] sm:$0xff]
    %v26 = vld [vmem:[%s0] sm:$0xff]
    %v27 = vld [vmem:[#allocation2] sm:$0xff]
    %v28 = vld [vmem:[#allocation2 + $0x8] sm:$0xff]
    %v29 = vlaneseq
    %v30 = vshrl.u32 %v29, 7
    %v31 = vsub.s32 0, %v30
    %v32 = vrot.slane %v25, %v31
    %vm33 = vcmask 130048
    %v35 = vsel %vm33, %v26, 0
    %37 = vmatprep.subr.mxu0 0.0
    %38 = vmatpush1.msra.mxu0 0.0
    %39 = vmatprep.subr.mxu0 0.0
    %40 = vmatpush1.msra.mxu0 0.0
    %41 = vmatprep.subr.mxu0 0.0
    %42 = vmatpush1.msra.mxu0 0.0
    %43 = vmatprep.subr.mxu0 0.0
    %44 = vmatpush1.msra.mxu0 0.0
    %45 = vmatprep.subr.mxu0 0.0
    %46 = vmatpush1.msra.mxu0 0.0
    %47 = vmatprep.subr.mxu0 0.0
    %48 = vmatpush1.msra.mxu0 0.0
    %49 = vmatprep.subr.mxu0 0.0
    %50 = vmatpush1.msra.mxu0 0.0
    %51 = vmatprep.subr.mxu0 0.0
    %52 = vmatpush1.msra.mxu0 0.0
    %53 = vmatprep.subr.mxu0 0.0
    %54 = vmatpush1.msra.mxu0 0.0
    %55 = vmatprep.subr.mxu0 0.0
    %56 = vmatpush1.msra.mxu0 0.0
    %57 = vmatprep.subr.mxu0 0.0
    %58 = vmatpush1.msra.mxu0 0.0
    %59 = vmatprep.subr.mxu0 0.0
    %60 = vmatpush1.msra.mxu0 0.0
    %61 = vmatprep.subr.mxu0 0.0
    %62 = vmatpush1.msra.mxu0 0.0
    %63 = vmatprep.subr.mxu0 0.0
    %64 = vmatpush1.msra.mxu0 0.0
    %65 = vmatprep.subr.mxu0 0.0
    %66 = vmatpush1.msra.mxu0 %v28
    %67 = vmatprep.subr.mxu0 0.0
    %68 = vmatpush1.msra.mxu0 %v27
    %69 = vmatprep.subr.mxu0 0.0
    %70 = vmatpush2.msra.mxu0 0.0
    %71 = vmatprep.subr.mxu0 0.0
    %72 = vmatpush2.msra.mxu0 0.0
    %73 = vmatprep.subr.mxu0 0.0
    %74 = vmatpush2.msra.mxu0 0.0
    %75 = vmatprep.subr.mxu0 0.0
    %76 = vmatpush2.msra.mxu0 0.0
    %77 = vmatprep.subr.mxu0 0.0
    %78 = vmatpush2.msra.mxu0 0.0
    %79 = vmatprep.subr.mxu0 0.0
    %80 = vmatpush2.msra.mxu0 0.0
    %81 = vmatprep.subr.mxu0 0.0
    %82 = vmatpush2.msra.mxu0 0.0
    %83 = vmatprep.subr.mxu0 0.0
    %84 = vmatpush2.msra.mxu0 0.0
    %85 = vmatprep.subr.mxu0 0.0
    %86 = vmatpush2.msra.mxu0 0.0
    %87 = vmatprep.subr.mxu0 0.0
    %88 = vmatpush2.msra.mxu0 0.0
    %89 = vmatprep.subr.mxu0 0.0
    %90 = vmatpush2.msra.mxu0 0.0
    %91 = vmatprep.subr.mxu0 0.0
    %92 = vmatpush2.msra.mxu0 0.0
    %93 = vmatprep.subr.mxu0 0.0
    %94 = vmatpush2.msra.mxu0 0.0
    %95 = vmatprep.subr.mxu0 0.0
    %96 = vmatpush2.msra.mxu0 0.0
    %97 = vmatprep.subr.mxu0 0.0
    %98 = vmatpush2.msra.mxu0 0.0
    %99 = vmatprep.subr.mxu0 0.0
    %100 = vmatpush2.msra.mxu0 0.0
    %101 = vmatprep.mubr.f32.mxu0 0.0
    %102 = vmatmul.mubr.f32.gmra.mxu0 %v35
    %v103 = vpop.f32.mrf.mxu0
    %v104 = vadd.f32 %v32, %v103
    %v105 = vpop.f32.mrf.mxu0
    %106 = vdwg.mxu0
    %v107 = vmax.f32 %v104, 0.0
    %v108 = vld [vmem:[#allocation2 + $0x10] sm:$0xff]
    %v109 = vld [vmem:[#allocation2 + $0x18] sm:$0xff]
    %v110 = vld [vmem:[#allocation2 + $0x20] sm:$0xff]
    %v111 = vld [vmem:[#allocation2 + $0x28] sm:$0xff]
    %v112 = vld [vmem:[#allocation2 + $0x30] sm:$0xff]
    %v113 = vld [vmem:[#allocation2 + $0x38] sm:$0xff]
    %v114 = vld [vmem:[#allocation2 + $0x40] sm:$0xff]
    %v115 = vld [vmem:[#allocation2 + $0x48] sm:$0xff]
    %v116 = vld [vmem:[#allocation2 + $0x50] sm:$0xff]
    %v117 = vld [vmem:[#allocation2 + $0x58] sm:$0xff]
    %v118 = vld [vmem:[#allocation2 + $0x60] sm:$0xff]
    %v119 = vld [vmem:[#allocation2 + $0x68] sm:$0xff]
    %v120 = vld [vmem:[#allocation2 + $0x70] sm:$0xff]
    %v121 = vld [vmem:[#allocation2 + $0x78] sm:$0xff]
    %v122 = vld [vmem:[#allocation2 + $0x80] sm:$0xff]
    %v123 = vld [vmem:[#allocation2 + $0x88] sm:$0xff]
    %v124 = vlaneseq
    %v125 = vshrl.u32 %v124, 7
    %v126 = vsub.s32 1, %v125
    %v127 = vrot.slane %v25, %v126
    %128 = vmatprep.subr.mxu0 0.0
    %129 = vmatpush1.msra.mxu0 %v123
    %130 = vmatprep.subr.mxu0 0.0
    %131 = vmatpush1.msra.mxu0 %v122
    %132 = vmatprep.subr.mxu0 0.0
    %133 = vmatpush1.msra.mxu0 %v121
    %134 = vmatprep.subr.mxu0 0.0
    %135 = vmatpush1.msra.mxu0 %v120
    %136 = vmatprep.subr.mxu0 0.0
    %137 = vmatpush1.msra.mxu0 %v119
    %138 = vmatprep.subr.mxu0 0.0
    %139 = vmatpush1.msra.mxu0 %v118
    %140 = vmatprep.subr.mxu0 0.0
    %141 = vmatpush1.msra.mxu0 %v117
    %142 = vmatprep.subr.mxu0 0.0
    %143 = vmatpush1.msra.mxu0 %v116
    %144 = vmatprep.subr.mxu0 0.0
    %145 = vmatpush1.msra.mxu0 %v115
    %146 = vmatprep.subr.mxu0 0.0
    %147 = vmatpush1.msra.mxu0 %v114
    %148 = vmatprep.subr.mxu0 0.0
    %149 = vmatpush1.msra.mxu0 %v113
    %150 = vmatprep.subr.mxu0 0.0
    %151 = vmatpush1.msra.mxu0 %v112
    %152 = vmatprep.subr.mxu0 0.0
    %153 = vmatpush1.msra.mxu0 %v111
    %154 = vmatprep.subr.mxu0 0.0
    %155 = vmatpush1.msra.mxu0 %v110
    %156 = vmatprep.subr.mxu0 0.0
    %157 = vmatpush1.msra.mxu0 %v109
    %158 = vmatprep.subr.mxu0 0.0
    %159 = vmatpush1.msra.mxu0 %v108
    %160 = vmatprep.subr.mxu0 0.0
    %161 = vmatpush2.msra.mxu0 0.0
    %162 = vmatprep.subr.mxu0 0.0
    %163 = vmatpush2.msra.mxu0 0.0
    %164 = vmatprep.subr.mxu0 0.0
    %165 = vmatpush2.msra.mxu0 0.0
    %166 = vmatprep.subr.mxu0 0.0
    %167 = vmatpush2.msra.mxu0 0.0
    %168 = vmatprep.subr.mxu0 0.0
    %169 = vmatpush2.msra.mxu0 0.0
    %170 = vmatprep.subr.mxu0 0.0
    %171 = vmatpush2.msra.mxu0 0.0
    %172 = vmatprep.subr.mxu0 0.0
    %173 = vmatpush2.msra.mxu0 0.0
    %174 = vmatprep.subr.mxu0 0.0
    %175 = vmatpush2.msra.mxu0 0.0
    %176 = vmatprep.subr.mxu0 0.0
    %177 = vmatpush2.msra.mxu0 0.0
    %178 = vmatprep.subr.mxu0 0.0
    %179 = vmatpush2.msra.mxu0 0.0
    %180 = vmatprep.subr.mxu0 0.0
    %181 = vmatpush2.msra.mxu0 0.0
    %182 = vmatprep.subr.mxu0 0.0
    %183 = vmatpush2.msra.mxu0 0.0
    %184 = vmatprep.subr.mxu0 0.0
    %185 = vmatpush2.msra.mxu0 0.0
    %186 = vmatprep.subr.mxu0 0.0
    %187 = vmatpush2.msra.mxu0 0.0
    %188 = vmatprep.subr.mxu0 0.0
    %189 = vmatpush2.msra.mxu0 0.0
    %190 = vmatprep.subr.mxu0 0.0
    %191 = vmatpush2.msra.mxu0 0.0
    %192 = vmatprep.mubr.f32.mxu0 0.0
    %193 = vmatmul.mubr.f32.gmra.mxu0 %v107
    %v194 = vpop.f32.mrf.mxu0
    %v195 = vadd.f32 %v127, %v194
    %v196 = vpop.f32.mrf.mxu0
    %197 = vdwg.mxu0
    %v198 = vmax.f32 %v195, 0.0
    %v199 = vld [vmem:[#allocation2 + $0x90] sm:$0xff]
    %v200 = vld [vmem:[#allocation2 + $0x98] sm:$0xff]
    %v201 = vld [vmem:[#allocation2 + $0xa0] sm:$0xff]
    %v202 = vld [vmem:[#allocation2 + $0xa8] sm:$0xff]
    %v203 = vld [vmem:[#allocation2 + $0xb0] sm:$0xff]
    %v204 = vld [vmem:[#allocation2 + $0xb8] sm:$0xff]
    %v205 = vld [vmem:[#allocation2 + $0xc0] sm:$0xff]
    %v206 = vld [vmem:[#allocation2 + $0xc8] sm:$0xff]
    %v207 = vld [vmem:[#allocation2 + $0xd0] sm:$0xff]
    %v208 = vld [vmem:[#allocation2 + $0xd8] sm:$0xff]
    %v209 = vld [vmem:[#allocation2 + $0xe0] sm:$0xff]
    %v210 = vld [vmem:[#allocation2 + $0xe8] sm:$0xff]
    %v211 = vld [vmem:[#allocation2 + $0xf0] sm:$0xff]
    %v212 = vld [vmem:[#allocation2 + $0xf8] sm:$0xff]
    %v213 = vld [vmem:[#allocation2 + $0x100] sm:$0xff]
    %v214 = vld [vmem:[#allocation2 + $0x108] sm:$0xff]
    %v215 = vlaneseq
    %v216 = vshrl.u32 %v215, 7
    %v217 = vsub.s32 2, %v216
    %v218 = vrot.slane %v25, %v217
    %219 = vmatprep.subr.mxu0 0.0
    %220 = vmatpush1.msra.mxu0 %v214
    %221 = vmatprep.subr.mxu0 0.0
    %222 = vmatpush1.msra.mxu0 %v213
    %223 = vmatprep.subr.mxu0 0.0
    %224 = vmatpush1.msra.mxu0 %v212
    %225 = vmatprep.subr.mxu0 0.0
    %226 = vmatpush1.msra.mxu0 %v211
    %227 = vmatprep.subr.mxu0 0.0
    %228 = vmatpush1.msra.mxu0 %v210
    %229 = vmatprep.subr.mxu0 0.0
    %230 = vmatpush1.msra.mxu0 %v209
    %231 = vmatprep.subr.mxu0 0.0
    %232 = vmatpush1.msra.mxu0 %v208
    %233 = vmatprep.subr.mxu0 0.0
    %234 = vmatpush1.msra.mxu0 %v207
    %235 = vmatprep.subr.mxu0 0.0
    %236 = vmatpush1.msra.mxu0 %v206
    %237 = vmatprep.subr.mxu0 0.0
    %238 = vmatpush1.msra.mxu0 %v205
    %239 = vmatprep.subr.mxu0 0.0
    %240 = vmatpush1.msra.mxu0 %v204
    %241 = vmatprep.subr.mxu0 0.0
    %242 = vmatpush1.msra.mxu0 %v203
    %243 = vmatprep.subr.mxu0 0.0
    %244 = vmatpush1.msra.mxu0 %v202
    %245 = vmatprep.subr.mxu0 0.0
    %246 = vmatpush1.msra.mxu0 %v201
    %247 = vmatprep.subr.mxu0 0.0
    %248 = vmatpush1.msra.mxu0 %v200
    %249 = vmatprep.subr.mxu0 0.0
    %250 = vmatpush1.msra.mxu0 %v199
    %251 = vmatprep.subr.mxu0 0.0
    %252 = vmatpush2.msra.mxu0 0.0
    %253 = vmatprep.subr.mxu0 0.0
    %254 = vmatpush2.msra.mxu0 0.0
    %255 = vmatprep.subr.mxu0 0.0
    %256 = vmatpush2.msra.mxu0 0.0
    %257 = vmatprep.subr.mxu0 0.0
    %258 = vmatpush2.msra.mxu0 0.0
    %259 = vmatprep.subr.mxu0 0.0
    %260 = vmatpush2.msra.mxu0 0.0
    %261 = vmatprep.subr.mxu0 0.0
    %262 = vmatpush2.msra.mxu0 0.0
    %263 = vmatprep.subr.mxu0 0.0
    %264 = vmatpush2.msra.mxu0 0.0
    %265 = vmatprep.subr.mxu0 0.0
    %266 = vmatpush2.msra.mxu0 0.0
    %267 = vmatprep.subr.mxu0 0.0
    %268 = vmatpush2.msra.mxu0 0.0
    %269 = vmatprep.subr.mxu0 0.0
    %270 = vmatpush2.msra.mxu0 0.0
    %271 = vmatprep.subr.mxu0 0.0
    %272 = vmatpush2.msra.mxu0 0.0
    %273 = vmatprep.subr.mxu0 0.0
    %274 = vmatpush2.msra.mxu0 0.0
    %275 = vmatprep.subr.mxu0 0.0
    %276 = vmatpush2.msra.mxu0 0.0
    %277 = vmatprep.subr.mxu0 0.0
    %278 = vmatpush2.msra.mxu0 0.0
    %279 = vmatprep.subr.mxu0 0.0
    %280 = vmatpush2.msra.mxu0 0.0
    %281 = vmatprep.subr.mxu0 0.0
    %282 = vmatpush2.msra.mxu0 0.0
    %283 = vmatprep.mubr.f32.mxu0 0.0
    %284 = vmatmul.mubr.f32.gmra.mxu0 %v198
    %v285 = vpop.f32.mrf.mxu0
    %v286 = vadd.f32 %v218, %v285
    %v287 = vpop.f32.mrf.mxu0
    %288 = vdwg.mxu0
    %289 = vst [vmem:[%s2] sm:$0xff] %v286
    // Predicated region
    $region14: #{qnetwork_forward.1} parent=1 // pred_check
      _
    $region15: #{qnetwork_forward.1} parent=1 // pred_check_branch
      %291 = sbr.rel (0) target = $region17
    $region16: #{qnetwork_forward.1} parent=1 // pred_region
      _
    $region17: #{qnetwork_forward.1} parent=1 // pred_fallthru
      _
    // Predicated region
    $region18: #{qnetwork_forward.1} parent=1 // pred_check
      _
    $region19: #{qnetwork_forward.1} parent=1 // pred_check_branch
      %293 = sbr.rel (0) target = $region21
    $region20: #{qnetwork_forward.1} parent=1 // pred_region
      _
    $region21: #{qnetwork_forward.1} parent=1 // pred_fallthru
      _
    %294 = vsyncpa [#allocation3], 1

</llo_original>
